<compile_context>
chip_gen: v7x
topology: tpu7x:2x2x1
jax: 0.10.0
libtpu: 0.0.40
codegen_flags: <defaults>
</compile_context>

<pallas_src>
import functools

import jax
import jax.numpy as jnp
from jax import lax
from jax.experimental import pallas as pl
from jax.experimental.pallas import tpu as pltpu


# Contract the last dims of both operands (A @ B^T) — the flash-attention
# q @ k^T dimension numbers; natively supported by the Mosaic matmul lowering.
_TRANS_B_DIMS = (((1,), (1,)), ((), ()))


def _direct_poisson_kernel(x_ref, h_ref, m_ref, v_ref, acc_ref, *, alpha):
    """One (i, k) grid step.

    i (parallel)  tiles the M measurement axis.
    k (arbitrary) tiles the N reduction axis of H (innermost / last).

    x_ref / m_ref / v_ref blocks are (B, tile_m)  -> lane-dense (M on lanes),
    resident across k and only touched in the finalize branch.
    h_ref block is (tile_m, tile_n), streamed in H's native row-major layout.
    acc_ref is the (tile_m, 1) f32 running row-sum of H for this M tile.
    """
    k = pl.program_id(1)

    @pl.when(k == 0)
    def _():
        acc_ref[...] = jnp.zeros_like(acc_ref)

    # Partial row-sum of H over this N tile: (tile_m, tile_n) -> (tile_m, 1).
    # Cross-lane reduce (XLU slot) — hidden behind the HBM-bound H stream.
    acc_ref[...] += jnp.sum(h_ref[...].astype(jnp.float32), axis=-1, keepdims=True)

    @pl.when(k == pl.num_programs(1) - 1)
    def _():
        x = x_ref[...].astype(jnp.float32)                    # (B, tile_m)
        b = x.shape[0]
        # Orientation change + batch broadcast in one tiny rank-1 matmul
        # (once per M tile, on the otherwise-idle MXU):
        #   h1[b, m] = sum_c ones[b, c] * acc[m, c] = acc[m, 0]
        h1 = lax.dot_general(
            jnp.ones((b, 1), jnp.float32),
            acc_ref[...],
            dimension_numbers=_TRANS_B_DIMS,
            preferred_element_type=jnp.float32,
        )                                                     # (B, tile_m)
        m_ref[...] = ((2.0 / alpha) * x - h1).astype(m_ref.dtype)
        v_ref[...] = ((4.0 / (alpha * alpha)) * x).astype(v_ref.dtype)


# ---------------------------------------------------------------------------
# Tiling policy
# ---------------------------------------------------------------------------

_VMEM_BUDGET_BYTES = 28 * 1024 * 1024  # headroom under the 32 MiB scoped limit


def _divisor_tiles(total, quantum):
    """Divisors of `total` that are multiples of `quantum` and < total, desc."""
    tiles = [d for d in range(quantum, total // 2 + 1, quantum) if total % d == 0]
    return sorted(tiles, reverse=True)


def _vmem_footprint(B, tile_m, tile_n, h_itemsize, x_itemsize):
    """Real VMEM footprint: double-buffered H + x/m/sigma blocks + acc scratch."""
    b_pad = ((B + 7) // 8) * 8                      # sublane padding of (B, tile_m)
    m_pad = max(tile_m, 128)                        # lane padding
    h_bytes = 2 * tile_m * tile_n * h_itemsize      # streamed H (double-buffered)
    xmv_bytes = 3 * 2 * b_pad * m_pad * x_itemsize  # x, m, sigma blocks (x2 buffers)
    acc_bytes = tile_m * 128 * 4                    # (tile_m, 1) f32, lane-padded
    return h_bytes + xmv_bytes + acc_bytes


def _pick_tiles(B, M, N, h_itemsize, x_itemsize):
    """Pick (tile_m, tile_n): full-N rows, shrink tile_m first, split M for megacore."""
    def fits(tm, tn):
        return _vmem_footprint(B, tm, tn, h_itemsize, x_itemsize) <= _VMEM_BUDGET_BYTES

    m_tiles = _divisor_tiles(M, 128)   # lane-aligned splits of M (for the (B, tile_m) blocks)

    # Prefer splitting M (>= 2 parallel i-steps -> both v7x TensorCores busy)
    # while keeping full-N rows for long contiguous DMA bursts.
    for tm in m_tiles:
        if fits(tm, N):
            return tm, N
    if fits(M, N):
        return M, N                    # M has no 128-aligned divisor: keep it whole
    # Even the smallest (tile_m, N) block is too big: tile N as well.
    tm = m_tiles[-1] if m_tiles else M
    for tn in _divisor_tiles(N, 128):
        if fits(tm, tn):
            return tm, tn
    return tm, N                       # pathological N: fall back to full rows


# ---------------------------------------------------------------------------
# Public wrappers
# ---------------------------------------------------------------------------

def direct_poisson_forward_and_sigma(x, H, alpha, *, tile_m=None, tile_n=None):
    """Fused DirectPoisson: returns (2/alpha*x - H.sum(-1), 4/alpha**2 * x).

    x: (B, M), H: (M, N) in its natural layout.
    """
    B, M = x.shape
    Mh, N = H.shape
    if Mh != M:
        raise ValueError(f"H rows ({Mh}) must match x measurements ({M})")

    h_isz = jnp.dtype(H.dtype).itemsize
    x_isz = jnp.dtype(x.dtype).itemsize
    auto_m, auto_n = _pick_tiles(B, M, N, h_isz, x_isz)
    tile_m = tile_m or auto_m
    tile_n = tile_n or auto_n

    if M % tile_m or N % tile_n:
        raise ValueError(f"tiles ({tile_m},{tile_n}) must divide (M,N)=({M},{N})")
    if tile_m != M and tile_m % 128:
        raise ValueError("tile_m must be a multiple of 128 (lane dim of x/m/sigma) or equal M")
    if tile_n != N and tile_n % 128:
        raise ValueError("tile_n must be a multiple of 128 or equal N")

    grid = (M // tile_m, N // tile_n)
    kernel = functools.partial(_direct_poisson_kernel, alpha=float(alpha))

    cost = pl.CostEstimate(
        flops=M * N + 3 * B * M,
        transcendentals=0,
        bytes_accessed=M * N * h_isz + 3 * B * M * x_isz,
    )

    m, v = pl.pallas_call(
        kernel,
        out_shape=(
            jax.ShapeDtypeStruct((B, M), x.dtype),
            jax.ShapeDtypeStruct((B, M), x.dtype),
        ),
        grid_spec=pltpu.PrefetchScalarGridSpec(
            num_scalar_prefetch=0,
            grid=grid,
            in_specs=[
                pl.BlockSpec((B, tile_m), lambda i, k: (0, i)),       # x, lane-dense, resident over k
                pl.BlockSpec((tile_m, tile_n), lambda i, k: (i, k)),  # H, streamed native layout
            ],
            out_specs=[
                pl.BlockSpec((B, tile_m), lambda i, k: (0, i)),       # m
                pl.BlockSpec((B, tile_m), lambda i, k: (0, i)),       # sigma
            ],
            scratch_shapes=[pltpu.VMEM((tile_m, 1), jnp.float32)],
        ),
        compiler_params=pltpu.CompilerParams(
            dimension_semantics=("parallel", "arbitrary"),
            vmem_limit_bytes=32 * 1024 * 1024,
        ),
        cost_estimate=cost,
    )(x, H)

    return m, v


def direct_poisson_forward(x, H, alpha, **kw):
    """Matches DirectPoisson.forward: 2/alpha * x - H.sum(-1)."""
    m, _ = direct_poisson_forward_and_sigma(x, H, alpha, **kw)
    return m


def direct_poisson_forward_cached(x, h_ones, alpha):
    """Forward with a precomputed H_ones = H.sum(-1) (reused measurement matrix).

    Plain jnp on purpose: once H_ones is cached, the per-call work is a trivial
    elementwise op that XLA fuses; a Pallas launch would be pure overhead.
    """
    return (2.0 / float(alpha)) * x - h_ones[None, :].astype(x.dtype)


def direct_poisson_sigma(x, alpha):
    """DirectPoisson.sigma: 4/alpha**2 * x (plain jnp; XLA fuses it)."""
    return (4.0 / (float(alpha) ** 2)) * x


# TODO(synk): denormalize_expe / unsplit / the MaxPool2d member are not part of
# forward()/sigma(); they are trivial elementwise/slicing ops best left to XLA.


if __name__ == "__main__":
    # Shapes consistent with the module: 32x32 images -> N = 1024,
    # M = 256 measurements, batch B = 2.
    B, M, N = 2, 256, 1024
    alpha = 10.0

    key = jax.random.PRNGKey(0)
    kx, kh = jax.random.split(key)
    x = jax.random.uniform(kx, (B, M), dtype=jnp.float32)
    H = jax.random.uniform(kh, (M, N), dtype=jnp.float32)  # measurement matrix

    m, var = direct_poisson_forward_and_sigma(x, H, alpha)
    m = jax.block_until_ready(m)
    var = jax.block_until_ready(var)

    m_only = jax.block_until_ready(direct_poisson_forward(x, H, alpha))
    var_jnp = jax.block_until_ready(direct_poisson_sigma(x, alpha))
    m_cached = jax.block_until_ready(
        direct_poisson_forward_cached(x, jnp.sum(H, axis=-1), alpha))

    # Reference (plain JAX)
    ref_m = 2.0 * x / alpha - jnp.sum(H, axis=-1)[None, :]
    ref_v = 4.0 * x / (alpha ** 2)

    assert m.shape == (B, M) and m.dtype == x.dtype
    assert var.shape == (B, M) and var.dtype == x.dtype
    assert jnp.allclose(m, ref_m, rtol=1e-5, atol=1e-3), "forward mismatch"
    assert jnp.allclose(m_only, ref_m, rtol=1e-5, atol=1e-3), "forward (m-only) mismatch"
    assert jnp.allclose(m_cached, ref_m, rtol=1e-5, atol=1e-3), "cached forward mismatch"
    assert jnp.allclose(var, ref_v, rtol=1e-6, atol=1e-6), "fused sigma mismatch"
    assert jnp.allclose(var_jnp, ref_v, rtol=1e-6, atol=1e-6), "sigma mismatch"

    print("KERNEL_OK")
</pallas_src>

<mosaic_0001>
module attributes {stable_mosaic.version = 11 : i64} {
  func.func @_direct_poisson_kernel(%arg0: i32, %arg1: i32, %arg2: memref<2x128xf32, #tpu.memory_space<vmem>>, %arg3: memref<128x1024xf32, #tpu.memory_space<vmem>>, %arg4: memref<2x128xf32, #tpu.memory_space<vmem>>, %arg5: memref<2x128xf32, #tpu.memory_space<vmem>>, %arg6: memref<128x1xf32, #tpu.memory_space<vmem>>) attributes {dimension_semantics = [#tpu.dimension_semantics<parallel>, #tpu.dimension_semantics<arbitrary>], iteration_bounds = array<i64: 2, 1>, scalar_prefetch = 0 : i64, scratch_operands = 1 : i64, tpu.core_type = #tpu.core_type<tc>, window_params = [{transform_indices = @transform_0, window_bounds = array<i64: 2, 128>}, {transform_indices = @transform_1, window_bounds = array<i64: 128, 1024>}, {transform_indices = @transform_2, window_bounds = array<i64: 2, 128>}, {transform_indices = @transform_3, window_bounds = array<i64: 2, 128>}]} {
    %c0_i32 = arith.constant 0 : i32
    %0 = arith.cmpi eq, %arg1, %c0_i32 : i32
    %1 = arith.extui %0 : i1 to i32
    %c0_i32_0 = arith.constant 0 : i32
    %2 = arith.cmpi ne, %1, %c0_i32_0 : i32
    scf.if %2 {
      %cst_8 = arith.constant 0.000000e+00 : f32
      %12 = vector.broadcast %cst_8 : f32 to vector<128x1xf32>
      %c0_9 = arith.constant 0 : index
      %c0_10 = arith.constant 0 : index
      %13 = vector.load %arg6[%c0_9, %c0_10] : memref<128x1xf32, #tpu.memory_space<vmem>>, vector<128x1xf32>
      tpu.vector_store %arg6[%c0_9, %c0_10], %12 {strides = array<i32>} : memref<128x1xf32, #tpu.memory_space<vmem>>, vector<128x1xf32>,
    } else {
    }
    %c0 = arith.constant 0 : index
    %c0_1 = arith.constant 0 : index
    %3 = vector.load %arg6[%c0, %c0_1] : memref<128x1xf32, #tpu.memory_space<vmem>>, vector<128x1xf32>
    %c0_2 = arith.constant 0 : index
    %c0_3 = arith.constant 0 : index
    %4 = vector.load %arg3[%c0_2, %c0_3] : memref<128x1024xf32, #tpu.memory_space<vmem>>, vector<128x1024xf32>
    %cst = arith.constant dense<0.000000e+00> : vector<128xf32>
    %5 = vector.multi_reduction <add>, %4, %cst [1] : vector<128x1024xf32> to vector<128xf32>
    %6 = vector.shape_cast %5 : vector<128xf32> to vector<128x1xf32>
    %7 = arith.addf %3, %6 : vector<128x1xf32>
    %c0_4 = arith.constant 0 : index
    %c0_5 = arith.constant 0 : index
    %8 = vector.load %arg6[%c0_4, %c0_5] : memref<128x1xf32, #tpu.memory_space<vmem>>, vector<128x1xf32>
    tpu.vector_store %arg6[%c0_4, %c0_5], %7 {strides = array<i32>} : memref<128x1xf32, #tpu.memory_space<vmem>>, vector<128x1xf32>,
    %c0_i32_6 = arith.constant 0 : i32
    %9 = arith.cmpi eq, %arg1, %c0_i32_6 : i32
    %10 = arith.extui %9 : i1 to i32
    %c0_i32_7 = arith.constant 0 : i32
    %11 = arith.cmpi ne, %10, %c0_i32_7 : i32
    scf.if %11 {
      %c0_8 = arith.constant 0 : index
      %c0_9 = arith.constant 0 : index
      %12 = vector.load %arg2[%c0_8, %c0_9] : memref<2x128xf32, #tpu.memory_space<vmem>>, vector<2x128xf32>
      %cst_10 = arith.constant 1.000000e+00 : f32
      %13 = vector.broadcast %cst_10 : f32 to vector<2x1xf32>
      %c0_11 = arith.constant 0 : index
      %c0_12 = arith.constant 0 : index
      %14 = vector.load %arg6[%c0_11, %c0_12] : memref<128x1xf32, #tpu.memory_space<vmem>>, vector<128x1xf32>
      %cst_13 = arith.constant dense<0.000000e+00> : vector<2x128xf32>
      %15 = tpu.matmul %13, %14, %cst_13 {dimension_numbers = #tpu.dot_dimension_numbers<[1], [1], [0], [0], [0, 0, 1, 0], [], []>} : vector<2x1xf32>, vector<128x1xf32>, vector<2x128xf32> -> vector<2x128xf32>
      %cst_14 = arith.constant 2.000000e-01 : f32
      %16 = vector.broadcast %cst_14 : f32 to vector<2x128xf32>
      %17 = arith.mulf %16, %12 : vector<2x128xf32>
      %18 = arith.subf %17, %15 : vector<2x128xf32>
      %c0_15 = arith.constant 0 : index
      %c0_16 = arith.constant 0 : index
      %19 = vector.load %arg4[%c0_15, %c0_16] : memref<2x128xf32, #tpu.memory_space<vmem>>, vector<2x128xf32>
      tpu.vector_store %arg4[%c0_15, %c0_16], %18 {strides = array<i32>} : memref<2x128xf32, #tpu.memory_space<vmem>>, vector<2x128xf32>,
      %cst_17 = arith.constant 4.000000e-02 : f32
      %20 = vector.broadcast %cst_17 : f32 to vector<2x128xf32>
      %21 = arith.mulf %20, %12 : vector<2x128xf32>
      %c0_18 = arith.constant 0 : index
      %c0_19 = arith.constant 0 : index
      %22 = vector.load %arg5[%c0_18, %c0_19] : memref<2x128xf32, #tpu.memory_space<vmem>>, vector<2x128xf32>
      tpu.vector_store %arg5[%c0_18, %c0_19], %21 {strides = array<i32>} : memref<2x128xf32, #tpu.memory_space<vmem>>, vector<2x128xf32>,
    } else {
    }
    return
  }
  func.func @transform_0(%arg0: i32, %arg1: i32) -> (i32, i32) {
    %c0_i32 = arith.constant 0 : i32
    %c0_i32_0 = arith.constant 0 : i32
    return %c0_i32, %arg0 : i32, i32
  }
  func.func @transform_1(%arg0: i32, %arg1: i32) -> (i32, i32) {
    %c0_i32 = arith.constant 0 : i32
    return %arg0, %arg1 : i32, i32
  }
  func.func @transform_2(%arg0: i32, %arg1: i32) -> (i32, i32) {
    %c0_i32 = arith.constant 0 : i32
    %c0_i32_0 = arith.constant 0 : i32
    return %c0_i32, %arg0 : i32, i32
  }
  func.func @transform_3(%arg0: i32, %arg1: i32) -> (i32, i32) {
    %c0_i32 = arith.constant 0 : i32
    %c0_i32_0 = arith.constant 0 : i32
    return %c0_i32, %arg0 : i32, i32
  }
}

</mosaic_0001>

<llo_original>
// kernel: tpu_custom_call.1
$region0: #{tpu_custom_call.1}
  #allocation0 [shape = 'u32[]', space=smem, size = 0x4, offset = 0x4, fixed_abs, tag = 'smem constant byte address 0x4 - core index']
  #allocation1 [shape = 'u32[144,128]{1,0:T(1,128)}', space=vmem, size = 0x12000, scoped, tag = 'internal scratch']
  #allocation2 [shape = 'f32[128,1]{1,0:T(8,128)}', space=vmem, size = 0x10000, scoped, tag = 'scratch operand']
  %s0 = inlined_call_operand.hbm [shape: f32[2,256], index: 0, kind: input, shape index: {}]
  %s1 = inlined_call_operand.hbm [shape: f32[256,1024], index: 1, kind: input, shape index: {}]
  %s2 = inlined_call_operand.hbm [shape: f32[2,256], index: 2, kind: output, shape index: {0}]
  %s3 = inlined_call_operand.hbm [shape: f32[2,256], index: 3, kind: output, shape index: {1}]
  %4 = xla_tuple %s2, %s3
  %s5 = sld [smem:[#allocation0]]
  $region65: #{tpu_custom_call.1} parent=0
    _
  %s7 = ssub.s32 1, %s5
  %s8 = scalar_select 0, %s7, %s5
  $region1: #{tpu_custom_call.1} parent=0
    #allocation3 [shape = 'u8[2048]{0}', space=vmem, size = 0x800, scoped, tag = 'input window, operand 0']
    #allocation4 [shape = 's32[2]{0}', space=sflag, size = 0x8, scoped, tag = 'scoped memory for tpu_custom_call.1']
    #allocation5 [shape = 's32[2]{0}', space=sflag, size = 0x8, scoped, tag = 'scoped memory for tpu_custom_call.1']
    #allocation6 [shape = 'u8[1048576]{0}', space=vmem, size = 0x100000, scoped, tag = 'input window, operand 1']
    #allocation7 [shape = 's32[2]{0}', space=sflag, size = 0x8, scoped, tag = 'scoped memory for tpu_custom_call.1']
    #allocation8 [shape = 'u8[2048]{0}', space=vmem, size = 0x800, scoped, tag = 'output window, operand 0']
    #allocation9 [shape = 'u8[2048]{0}', space=vmem, size = 0x800, scoped, tag = 'output window, operand 1']
    #allocation10 [shape = 's32[2]{0}', space=sflag, size = 0x8, scoped, tag = 'scoped memory for tpu_custom_call.1']
    %9 = vsyncpa [#allocation4], 0
    %s10 = scalar_lea.sflag [#allocation4], 1
    %11 = vsyncpa %s10, 0
    %12 = vsyncpa [#allocation7], 0
    %s13 = scalar_lea.sflag [#allocation7], 1
    %14 = vsyncpa %s13, 0
    %15 = vsyncpa [#allocation5], 0
    %s16 = scalar_lea.sflag [#allocation5], 1
    %17 = vsyncpa %s16, 0
    %18 = vsyncpa [#allocation10], 0
    %s19 = scalar_lea.sflag [#allocation10], 1
    %20 = vsyncpa %s19, 0
    loop: start=0, step=1, limit=4
    $region2: #{tpu_custom_call.1} parent=1 // loop_pre_header
      _
    $region3: #{tpu_custom_call.1} parent=1 // loop_header
      %s22 = sphi 0, %s26
      %p23 = scmp.ge.s32.totalorder %s22, 4
      %s29 = sphi 0, %s41
      %s30 = sphi 0, %s37
      %s31 = sphi 0, %s29
      %s32 = sphi 0, %s30
      %s33 = sphi 0, %s31
      %s34 = sphi 0, %s32
      %s44 = sphi 0, %s46
      %s47 = sphi 0, %s44
      %s48 = sphi 0, %s47
      %s64 = sphi 0, %s48
      %s72 = sphi 0, %s74
      %s75 = sphi 0, %s72
      %s76 = sphi 0, %s75
      %s92 = sphi 0, %s76
      %s98 = sphi 0, %s100
      %s101 = sphi 0, %s98
      %s102 = sphi 0, %s101
      %s118 = sphi 0, %s102
      %s124 = sphi 0, %s126
      %s127 = sphi 0, %s124
      %s128 = sphi 0, %s127
      %s144 = sphi 0, %s128
    $region4: #{tpu_custom_call.1} parent=1 // loop_header_branch
      %25 = sbr.rel (%p23) target = $region8
    $region5: #{tpu_custom_call.1} parent=1 // loop_body
      %s27 = ssub.s32 %s22, 1
      %s28 = ssub.s32 %s22, 2
      %s35 = sadd.s32 1, %s30
      %p36 = scmp.ge.s32.totalorder %s35, 1
      %s37 = scalar_select %p36, 0, %s35
      %s38 = sadd.s32 1, %s29
      %s39 = scalar_select %p36, %s38, %s29
      %p40 = scmp.ge.s32.totalorder %s39, 2
      %s41 = scalar_select %p40, 0, %s39
      %s42 = ssub.s32 %s29, %s41
      %p43 = scmp.eq.s32.totalorder %s42, 0
      %s45 = sadd.s32 %s44, 1
      %s46 = scalar_select %p43, %s44, %s45
      %p49 = pneg %p43
      %p50 = scmp.eq.s32.totalorder %s22, 1
      %p51 = por %p49, %p50
      %p52 = scmp.ne.s32.totalorder %s44, %s47
      %p53 = scmp.eq.s32.totalorder %s22, 0
      %p54 = por %p52, %p53
      %p55 = scmp.ne.s32.totalorder %s44, %s47
      %p56 = scmp.eq.s32.totalorder %s27, 1
      %p57 = por %p55, %p56
      %p58 = scmp.ne.s32.totalorder %s47, %s48
      %p59 = scmp.eq.s32.totalorder %s27, 0
      %p60 = por %p58, %p59
      %p61 = scmp.ne.s32.totalorder %s47, %s48
      %p62 = scmp.eq.s32.totalorder %s28, 1
      %p63 = por %p61, %p62
      %p65 = scmp.ne.s32.totalorder %s48, %s64
      %p66 = scmp.eq.s32.totalorder %s28, 0
      %p67 = por %p65, %p66
      %s68 = ssub.s32 %s29, %s41
      %s69 = ssub.s32 %s30, %s37
      %s70 = sor.u32 %s68, %s69
      %p71 = scmp.eq.s32.totalorder %s70, 0
      %s73 = sadd.s32 %s72, 1
      %s74 = scalar_select %p71, %s72, %s73
      %p77 = pneg %p71
      %p78 = scmp.eq.s32.totalorder %s22, 1
      %p79 = por %p77, %p78
      %p80 = scmp.ne.s32.totalorder %s72, %s75
      %p81 = scmp.eq.s32.totalorder %s22, 0
      %p82 = por %p80, %p81
      %p83 = scmp.ne.s32.totalorder %s72, %s75
      %p84 = scmp.eq.s32.totalorder %s27, 1
      %p85 = por %p83, %p84
      %p86 = scmp.ne.s32.totalorder %s75, %s76
      %p87 = scmp.eq.s32.totalorder %s27, 0
      %p88 = por %p86, %p87
      %p89 = scmp.ne.s32.totalorder %s75, %s76
      %p90 = scmp.eq.s32.totalorder %s28, 1
      %p91 = por %p89, %p90
      %p93 = scmp.ne.s32.totalorder %s76, %s92
      %p94 = scmp.eq.s32.totalorder %s28, 0
      %p95 = por %p93, %p94
      %s96 = ssub.s32 %s29, %s41
      %p97 = scmp.eq.s32.totalorder %s96, 0
      %s99 = sadd.s32 %s98, 1
      %s100 = scalar_select %p97, %s98, %s99
      %p103 = pneg %p97
      %p104 = scmp.eq.s32.totalorder %s22, 1
      %p105 = por %p103, %p104
      %p106 = scmp.ne.s32.totalorder %s98, %s101
      %p107 = scmp.eq.s32.totalorder %s22, 0
      %p108 = por %p106, %p107
      %p109 = scmp.ne.s32.totalorder %s98, %s101
      %p110 = scmp.eq.s32.totalorder %s27, 1
      %p111 = por %p109, %p110
      %p112 = scmp.ne.s32.totalorder %s101, %s102
      %p113 = scmp.eq.s32.totalorder %s27, 0
      %p114 = por %p112, %p113
      %p115 = scmp.ne.s32.totalorder %s101, %s102
      %p116 = scmp.eq.s32.totalorder %s28, 1
      %p117 = por %p115, %p116
      %p119 = scmp.ne.s32.totalorder %s102, %s118
      %p120 = scmp.eq.s32.totalorder %s28, 0
      %p121 = por %p119, %p120
      %s122 = ssub.s32 %s29, %s41
      %p123 = scmp.eq.s32.totalorder %s122, 0
      %s125 = sadd.s32 %s124, 1
      %s126 = scalar_select %p123, %s124, %s125
      %p129 = pneg %p123
      %p130 = scmp.eq.s32.totalorder %s22, 1
      %p131 = por %p129, %p130
      %p132 = scmp.ne.s32.totalorder %s124, %s127
      %p133 = scmp.eq.s32.totalorder %s22, 0
      %p134 = por %p132, %p133
      %p135 = scmp.ne.s32.totalorder %s124, %s127
      %p136 = scmp.eq.s32.totalorder %s27, 1
      %p137 = por %p135, %p136
      %p138 = scmp.ne.s32.totalorder %s127, %s128
      %p139 = scmp.eq.s32.totalorder %s27, 0
      %p140 = por %p138, %p139
      %p141 = scmp.ne.s32.totalorder %s127, %s128
      %p142 = scmp.eq.s32.totalorder %s28, 1
      %p143 = por %p141, %p142
      %p145 = scmp.ne.s32.totalorder %s128, %s144
      %p146 = scmp.eq.s32.totalorder %s28, 0
      %p147 = por %p145, %p146
      %p148 = scmp.le.s32.totalorder 1, %s22
      %p149 = scmp.lt.s32.totalorder %s22, 3
      %p150 = pnand %p148, %p149
      %p151 = pneg %p150
      // Predicated region
      $region9: #{tpu_custom_call.1} parent=5 // pred_check
        _
      $region10: #{tpu_custom_call.1} parent=5 // pred_check_branch
        %153 = sbr.rel (%p150) target = $region12
      $region11: #{tpu_custom_call.1} parent=5 // pred_region
        %s154 = ssub.s32 %s22, 1
      $region12: #{tpu_custom_call.1} parent=5 // pred_fallthru
        _
      %p155 = scmp.lt.s32.totalorder %s22, 2
      // Predicated region
      $region13: #{tpu_custom_call.1} parent=5 // pred_check
        %p156 = pneg %p155
      $region14: #{tpu_custom_call.1} parent=5 // pred_check_branch
        %158 = sbr.rel (%p156) target = $region16
      $region15: #{tpu_custom_call.1} parent=5 // pred_region
        // Predicated region
        $region17: #{tpu_custom_call.1} parent=15 // pred_check
          %p159 = pneg %p54
        $region18: #{tpu_custom_call.1} parent=15 // pred_check_branch
          %161 = sbr.rel (%p159) target = $region20
        $region19: #{tpu_custom_call.1} parent=15 // pred_region
          %s162 = sand.u32 %s44, 1
          %s163 = scalar_lea.sflag [#allocation4], %s162
          %s164 = sand.u32 %s44, 1
          %s165 = smul.addr %s164, 2
          %s166 = scalar_lea.vmem [#allocation3], %s165
          %s168 = ssub.s32 32, 32
          %169 = vsyncadd %s163, %s168
          %s170 = smul.addr %s29, 32
          %s171 = scalar_lea.hbm %s0, %s170
          %s173 = sshll.u32 %s166, 4
          %s174 = int_to_ptr.vmem [resolvable:$true] %s173
          %176 = dma.hbm_to_vmem [thread:$0]  %s171, 32, %s174, %s163
        $region20: #{tpu_custom_call.1} parent=15 // pred_fallthru
          _
        // Predicated region
        $region21: #{tpu_custom_call.1} parent=15 // pred_check
          %p177 = pneg %p82
        $region22: #{tpu_custom_call.1} parent=15 // pred_check_branch
          %179 = sbr.rel (%p177) target = $region24
        $region23: #{tpu_custom_call.1} parent=15 // pred_region
          %s180 = sand.u32 %s72, 1
          %s181 = scalar_lea.sflag [#allocation7], %s180
          %s182 = sand.u32 %s72, 1
          %s183 = smul.addr %s182, 1024
          %s184 = scalar_lea.vmem [#allocation6], %s183
          %s185 = smul.u32 16, %s29
          %s186 = smul.u32 8, %s30
          %s188 = ssub.s32 16384, 16384
          %189 = vsyncadd %s181, %s188
          %s190 = smul.addr %s185, 8
          %s191 = sadd.s32 %s186, %s190
          %s192 = smul.addr %s191, 128
          %s193 = scalar_lea.hbm %s1, %s192
          %s194 = sshll.u32 %s184, 4
          %s195 = int_to_ptr.vmem [resolvable:$true] %s194
          %200 = dma.hbm_to_vmem [thread:$0]  %s193, 16384, %s195, %s181, 1024, 1024, 64
        $region24: #{tpu_custom_call.1} parent=15 // pred_fallthru
          _
      $region16: #{tpu_custom_call.1} parent=5 // pred_fallthru
        _
      %p201 = scmp.le.s32.totalorder 1, %s22
      %p202 = scmp.lt.s32.totalorder %s22, 3
      %p203 = pnand %p201, %p202
      %p204 = pneg %p203
      // Predicated region
      $region25: #{tpu_custom_call.1} parent=5 // pred_check
        _
      $region26: #{tpu_custom_call.1} parent=5 // pred_check_branch
        %206 = sbr.rel (%p203) target = $region28
      $region27: #{tpu_custom_call.1} parent=5 // pred_region
        %s207 = ssub.s32 %s22, 1
        %s208 = sand.u32 %s47, 1
        %s209 = scalar_lea.sflag [#allocation4], %s208
        %s210 = sand.u32 %s47, 1
        %s211 = smul.addr %s210, 2
        %s212 = scalar_lea.vmem [#allocation3], %s211
        // Predicated region
        $region29: #{tpu_custom_call.1} parent=27 // pred_check
          %p213 = pneg %p60
        $region30: #{tpu_custom_call.1} parent=27 // pred_check_branch
          %215 = sbr.rel (%p213) target = $region32
        $region31: #{tpu_custom_call.1} parent=27 // pred_region
          %216 = dma.done %s209, 32
        $region32: #{tpu_custom_call.1} parent=27 // pred_fallthru
          _
        %s217 = sand.u32 %s75, 1
        %s218 = scalar_lea.sflag [#allocation7], %s217
        %s219 = sand.u32 %s75, 1
        %s220 = smul.addr %s219, 1024
        %s221 = scalar_lea.vmem [#allocation6], %s220
        // Predicated region
        $region33: #{tpu_custom_call.1} parent=27 // pred_check
          %p222 = pneg %p88
        $region34: #{tpu_custom_call.1} parent=27 // pred_check_branch
          %224 = sbr.rel (%p222) target = $region36
        $region35: #{tpu_custom_call.1} parent=27 // pred_region
          %225 = dma.done %s218, 16384
        $region36: #{tpu_custom_call.1} parent=27 // pred_fallthru
          _
        %s226 = sand.u32 %s47, 1
        %s227 = scalar_lea.sflag [#allocation4], %s226
        %s228 = sand.u32 %s47, 1
        %s229 = smul.addr %s228, 2
        %s230 = scalar_lea.vmem [#allocation3], %s229
        %p231 = pneg %p60
        %p232 = pneg %p57
        %s233 = sand.u32 %s75, 1
        %s234 = scalar_lea.sflag [#allocation7], %s233
        %s235 = sand.u32 %s75, 1
        %s236 = smul.addr %s235, 1024
        %s237 = scalar_lea.vmem [#allocation6], %s236
        %p238 = pneg %p88
        %p239 = pneg %p85
        %p240 = pneg %p114
        %p241 = pneg %p111
        %s242 = sand.u32 %s101, 1
        %s243 = scalar_lea.sflag [#allocation5], %s242
        %s244 = sand.u32 %s101, 1
        %s245 = smul.addr %s244, 2
        %s246 = scalar_lea.vmem [#allocation8], %s245
        %p247 = pneg %p140
        %p248 = pneg %p137
        %s249 = sand.u32 %s127, 1
        %s250 = scalar_lea.sflag [#allocation10], %s249
        %s251 = sand.u32 %s127, 1
        %s252 = smul.addr %s251, 2
        %s253 = scalar_lea.vmem [#allocation9], %s252
        %s254 = smul.u32 16, %s31
        %s255 = smul.u32 8, %s32
        %p256 = scmp.eq.s32.totalorder %s32, 0
        // Predicated region
        $region37: #{tpu_custom_call.1} parent=27 // pred_check
          %p257 = pneg %p256
        $region38: #{tpu_custom_call.1} parent=27 // pred_check_branch
          %259 = sbr.rel (%p257) target = $region40
        $region39: #{tpu_custom_call.1} parent=27 // pred_region
          %vm260 = vcmask 7168
          %261 = vst.msk [vmem:[#allocation2] sm:$0xff] %vm260, 0.0
          %262 = vst.msk [vmem:[#allocation2 + $0x8] sm:$0xff] %vm260, 0.0
          %263 = vst.msk [vmem:[#allocation2 + $0x10] sm:$0xff] %vm260, 0.0
          %264 = vst.msk [vmem:[#allocation2 + $0x18] sm:$0xff] %vm260, 0.0
          %265 = vst.msk [vmem:[#allocation2 + $0x20] sm:$0xff] %vm260, 0.0
          %266 = vst.msk [vmem:[#allocation2 + $0x28] sm:$0xff] %vm260, 0.0
          %267 = vst.msk [vmem:[#allocation2 + $0x30] sm:$0xff] %vm260, 0.0
          %268 = vst.msk [vmem:[#allocation2 + $0x38] sm:$0xff] %vm260, 0.0
          %269 = vst.msk [vmem:[#allocation2 + $0x40] sm:$0xff] %vm260, 0.0
          %270 = vst.msk [vmem:[#allocation2 + $0x48] sm:$0xff] %vm260, 0.0
          %271 = vst.msk [vmem:[#allocation2 + $0x50] sm:$0xff] %vm260, 0.0
          %272 = vst.msk [vmem:[#allocation2 + $0x58] sm:$0xff] %vm260, 0.0
          %273 = vst.msk [vmem:[#allocation2 + $0x60] sm:$0xff] %vm260, 0.0
          %274 = vst.msk [vmem:[#allocation2 + $0x68] sm:$0xff] %vm260, 0.0
          %275 = vst.msk [vmem:[#allocation2 + $0x70] sm:$0xff] %vm260, 0.0
          %276 = vst.msk [vmem:[#allocation2 + $0x78] sm:$0xff] %vm260, 0.0
        $region40: #{tpu_custom_call.1} parent=27 // pred_fallthru
          _
        %v277 = vld [vmem:[#allocation2] sm:$0xff]
        %v278 = vld [vmem:[#allocation2 + $0x8] sm:$0xff]
        %v279 = vld [vmem:[#allocation2 + $0x10] sm:$0xff]
        %v280 = vld [vmem:[#allocation2 + $0x18] sm:$0xff]
        %v281 = vld [vmem:[#allocation2 + $0x20] sm:$0xff]
        %v282 = vld [vmem:[#allocation2 + $0x28] sm:$0xff]
        %v283 = vld [vmem:[#allocation2 + $0x30] sm:$0xff]
        %v284 = vld [vmem:[#allocation2 + $0x38] sm:$0xff]
        %v285 = vld [vmem:[#allocation2 + $0x40] sm:$0xff]
        %v286 = vld [vmem:[#allocation2 + $0x48] sm:$0xff]
        %v287 = vld [vmem:[#allocation2 + $0x50] sm:$0xff]
        %v288 = vld [vmem:[#allocation2 + $0x58] sm:$0xff]
        %v289 = vld [vmem:[#allocation2 + $0x60] sm:$0xff]
        %v290 = vld [vmem:[#allocation2 + $0x68] sm:$0xff]
        %v291 = vld [vmem:[#allocation2 + $0x70] sm:$0xff]
        %v292 = vld [vmem:[#allocation2 + $0x78] sm:$0xff]
        %v293 = vld [vmem:[%s221] sm:$0xff]
        %v294 = vld [vmem:[%s221 + $0x8] sm:$0xff]
        %v295 = vld [vmem:[%s221 + $0x10] sm:$0xff]
        %v296 = vld [vmem:[%s221 + $0x18] sm:$0xff]
        %v297 = vld [vmem:[%s221 + $0x20] sm:$0xff]
        %v298 = vld [vmem:[%s221 + $0x28] sm:$0xff]
        %v299 = vld [vmem:[%s221 + $0x30] sm:$0xff]
        %v300 = vld [vmem:[%s221 + $0x38] sm:$0xff]
        %v301 = vld [vmem:[%s221 + $0x40] sm:$0xff]
        %v302 = vld [vmem:[%s221 + $0x48] sm:$0xff]
        %v303 = vld [vmem:[%s221 + $0x50] sm:$0xff]
        %v304 = vld [vmem:[%s221 + $0x58] sm:$0xff]
        %v305 = vld [vmem:[%s221 + $0x60] sm:$0xff]
        %v306 = vld [vmem:[%s221 + $0x68] sm:$0xff]
        %v307 = vld [vmem:[%s221 + $0x70] sm:$0xff]
        %v308 = vld [vmem:[%s221 + $0x78] sm:$0xff]
        %v309 = vld [vmem:[%s221 + $0x80] sm:$0xff]
        %v310 = vld [vmem:[%s221 + $0x88] sm:$0xff]
        %v311 = vld [vmem:[%s221 + $0x90] sm:$0xff]
        %v312 = vld [vmem:[%s221 + $0x98] sm:$0xff]
        %v313 = vld [vmem:[%s221 + $0xa0] sm:$0xff]
        %v314 = vld [vmem:[%s221 + $0xa8] sm:$0xff]
        %v315 = vld [vmem:[%s221 + $0xb0] sm:$0xff]
        %v316 = vld [vmem:[%s221 + $0xb8] sm:$0xff]
        %v317 = vld [vmem:[%s221 + $0xc0] sm:$0xff]
        %v318 = vld [vmem:[%s221 + $0xc8] sm:$0xff]
        %v319 = vld [vmem:[%s221 + $0xd0] sm:$0xff]
        %v320 = vld [vmem:[%s221 + $0xd8] sm:$0xff]
        %v321 = vld [vmem:[%s221 + $0xe0] sm:$0xff]
        %v322 = vld [vmem:[%s221 + $0xe8] sm:$0xff]
        %v323 = vld [vmem:[%s221 + $0xf0] sm:$0xff]
        %v324 = vld [vmem:[%s221 + $0xf8] sm:$0xff]
        %v325 = vld [vmem:[%s221 + $0x100] sm:$0xff]
        %v326 = vld [vmem:[%s221 + $0x108] sm:$0xff]
        %v327 = vld [vmem:[%s221 + $0x110] sm:$0xff]
        %v328 = vld [vmem:[%s221 + $0x118] sm:$0xff]
        %v329 = vld [vmem:[%s221 + $0x120] sm:$0xff]
        %v330 = vld [vmem:[%s221 + $0x128] sm:$0xff]
        %v331 = vld [vmem:[%s221 + $0x130] sm:$0xff]
        %v332 = vld [vmem:[%s221 + $0x138] sm:$0xff]
        %v333 = vld [vmem:[%s221 + $0x140] sm:$0xff]
        %v334 = vld [vmem:[%s221 + $0x148] sm:$0xff]
        %v335 = vld [vmem:[%s221 + $0x150] sm:$0xff]
        %v336 = vld [vmem:[%s221 + $0x158] sm:$0xff]
        %v337 = vld [vmem:[%s221 + $0x160] sm:$0xff]
        %v338 = vld [vmem:[%s221 + $0x168] sm:$0xff]
        %v339 = vld [vmem:[%s221 + $0x170] sm:$0xff]
        %v340 = vld [vmem:[%s221 + $0x178] sm:$0xff]
        %v341 = vld [vmem:[%s221 + $0x180] sm:$0xff]
        %v342 = vld [vmem:[%s221 + $0x188] sm:$0xff]
        %v343 = vld [vmem:[%s221 + $0x190] sm:$0xff]
        %v344 = vld [vmem:[%s221 + $0x198] sm:$0xff]
        %v345 = vld [vmem:[%s221 + $0x1a0] sm:$0xff]
        %v346 = vld [vmem:[%s221 + $0x1a8] sm:$0xff]
        %v347 = vld [vmem:[%s221 + $0x1b0] sm:$0xff]
        %v348 = vld [vmem:[%s221 + $0x1b8] sm:$0xff]
        %v349 = vld [vmem:[%s221 + $0x1c0] sm:$0xff]
        %v350 = vld [vmem:[%s221 + $0x1c8] sm:$0xff]
        %v351 = vld [vmem:[%s221 + $0x1d0] sm:$0xff]
        %v352 = vld [vmem:[%s221 + $0x1d8] sm:$0xff]
        %v353 = vld [vmem:[%s221 + $0x1e0] sm:$0xff]
        %v354 = vld [vmem:[%s221 + $0x1e8] sm:$0xff]
        %v355 = vld [vmem:[%s221 + $0x1f0] sm:$0xff]
        %v356 = vld [vmem:[%s221 + $0x1f8] sm:$0xff]
        %v357 = vld [vmem:[%s221 + $0x200] sm:$0xff]
        %v358 = vld [vmem:[%s221 + $0x208] sm:$0xff]
        %v359 = vld [vmem:[%s221 + $0x210] sm:$0xff]
        %v360 = vld [vmem:[%s221 + $0x218] sm:$0xff]
        %v361 = vld [vmem:[%s221 + $0x220] sm:$0xff]
        %v362 = vld [vmem:[%s221 + $0x228] sm:$0xff]
        %v363 = vld [vmem:[%s221 + $0x230] sm:$0xff]
        %v364 = vld [vmem:[%s221 + $0x238] sm:$0xff]
        %v365 = vld [vmem:[%s221 + $0x240] sm:$0xff]
        %v366 = vld [vmem:[%s221 + $0x248] sm:$0xff]
        %v367 = vld [vmem:[%s221 + $0x250] sm:$0xff]
        %v368 = vld [vmem:[%s221 + $0x258] sm:$0xff]
        %v369 = vld [vmem:[%s221 + $0x260] sm:$0xff]
        %v370 = vld [vmem:[%s221 + $0x268] sm:$0xff]
        %v371 = vld [vmem:[%s221 + $0x270] sm:$0xff]
        %v372 = vld [vmem:[%s221 + $0x278] sm:$0xff]
        %v373 = vld [vmem:[%s221 + $0x280] sm:$0xff]
        %v374 = vld [vmem:[%s221 + $0x288] sm:$0xff]
        %v375 = vld [vmem:[%s221 + $0x290] sm:$0xff]
        %v376 = vld [vmem:[%s221 + $0x298] sm:$0xff]
        %v377 = vld [vmem:[%s221 + $0x2a0] sm:$0xff]
        %v378 = vld [vmem:[%s221 + $0x2a8] sm:$0xff]
        %v379 = vld [vmem:[%s221 + $0x2b0] sm:$0xff]
        %v380 = vld [vmem:[%s221 + $0x2b8] sm:$0xff]
        %v381 = vld [vmem:[%s221 + $0x2c0] sm:$0xff]
        %v382 = vld [vmem:[%s221 + $0x2c8] sm:$0xff]
        %v383 = vld [vmem:[%s221 + $0x2d0] sm:$0xff]
        %v384 = vld [vmem:[%s221 + $0x2d8] sm:$0xff]
        %v385 = vld [vmem:[%s221 + $0x2e0] sm:$0xff]
        %v386 = vld [vmem:[%s221 + $0x2e8] sm:$0xff]
        %v387 = vld [vmem:[%s221 + $0x2f0] sm:$0xff]
        %v388 = vld [vmem:[%s221 + $0x2f8] sm:$0xff]
        %v389 = vld [vmem:[%s221 + $0x300] sm:$0xff]
        %v390 = vld [vmem:[%s221 + $0x308] sm:$0xff]
        %v391 = vld [vmem:[%s221 + $0x310] sm:$0xff]
        %v392 = vld [vmem:[%s221 + $0x318] sm:$0xff]
        %v393 = vld [vmem:[%s221 + $0x320] sm:$0xff]
        %v394 = vld [vmem:[%s221 + $0x328] sm:$0xff]
        %v395 = vld [vmem:[%s221 + $0x330] sm:$0xff]
        %v396 = vld [vmem:[%s221 + $0x338] sm:$0xff]
        %v397 = vld [vmem:[%s221 + $0x340] sm:$0xff]
        %v398 = vld [vmem:[%s221 + $0x348] sm:$0xff]
        %v399 = vld [vmem:[%s221 + $0x350] sm:$0xff]
        %v400 = vld [vmem:[%s221 + $0x358] sm:$0xff]
        %v401 = vld [vmem:[%s221 + $0x360] sm:$0xff]
        %v402 = vld [vmem:[%s221 + $0x368] sm:$0xff]
        %v403 = vld [vmem:[%s221 + $0x370] sm:$0xff]
        %v404 = vld [vmem:[%s221 + $0x378] sm:$0xff]
        %v405 = vld [vmem:[%s221 + $0x380] sm:$0xff]
        %v406 = vld [vmem:[%s221 + $0x388] sm:$0xff]
        %v407 = vld [vmem:[%s221 + $0x390] sm:$0xff]
        %v408 = vld [vmem:[%s221 + $0x398] sm:$0xff]
        %v409 = vld [vmem:[%s221 + $0x3a0] sm:$0xff]
        %v410 = vld [vmem:[%s221 + $0x3a8] sm:$0xff]
        %v411 = vld [vmem:[%s221 + $0x3b0] sm:$0xff]
        %v412 = vld [vmem:[%s221 + $0x3b8] sm:$0xff]
        %v413 = vld [vmem:[%s221 + $0x3c0] sm:$0xff]
        %v414 = vld [vmem:[%s221 + $0x3c8] sm:$0xff]
        %v415 = vld [vmem:[%s221 + $0x3d0] sm:$0xff]
        %v416 = vld [vmem:[%s221 + $0x3d8] sm:$0xff]
        %v417 = vld [vmem:[%s221 + $0x3e0] sm:$0xff]
        %v418 = vld [vmem:[%s221 + $0x3e8] sm:$0xff]
        %v419 = vld [vmem:[%s221 + $0x3f0] sm:$0xff]
        %v420 = vld [vmem:[%s221 + $0x3f8] sm:$0xff]
        %v421 = vadd.f32 %v293, %v294
        %v422 = vadd.f32 %v421, %v295
        %v423 = vadd.f32 %v422, %v296
        %v424 = vadd.f32 %v423, %v297
        %v425 = vadd.f32 %v424, %v298
        %v426 = vadd.f32 %v425, %v299
        %v427 = vadd.f32 %v426, %v300
        %428 = vadd.xlane.f32.xlu0 %v427
        %v429 = vpop.xlane.xlu0 %428
        %v430 = vadd.f32 %v301, %v302
        %v431 = vadd.f32 %v430, %v303
        %v432 = vadd.f32 %v431, %v304
        %v433 = vadd.f32 %v432, %v305
        %v434 = vadd.f32 %v433, %v306
        %v435 = vadd.f32 %v434, %v307
        %v436 = vadd.f32 %v435, %v308
        %437 = vadd.xlane.f32.xlu0 %v436
        %v438 = vpop.xlane.xlu0 %437
        %v439 = vadd.f32 %v309, %v310
        %v440 = vadd.f32 %v439, %v311
        %v441 = vadd.f32 %v440, %v312
        %v442 = vadd.f32 %v441, %v313
        %v443 = vadd.f32 %v442, %v314
        %v444 = vadd.f32 %v443, %v315
        %v445 = vadd.f32 %v444, %v316
        %446 = vadd.xlane.f32.xlu0 %v445
        %v447 = vpop.xlane.xlu0 %446
        %v448 = vadd.f32 %v317, %v318
        %v449 = vadd.f32 %v448, %v319
        %v450 = vadd.f32 %v449, %v320
        %v451 = vadd.f32 %v450, %v321
        %v452 = vadd.f32 %v451, %v322
        %v453 = vadd.f32 %v452, %v323
        %v454 = vadd.f32 %v453, %v324
        %455 = vadd.xlane.f32.xlu0 %v454
        %v456 = vpop.xlane.xlu0 %455
        %v457 = vadd.f32 %v325, %v326
        %v458 = vadd.f32 %v457, %v327
        %v459 = vadd.f32 %v458, %v328
        %v460 = vadd.f32 %v459, %v329
        %v461 = vadd.f32 %v460, %v330
        %v462 = vadd.f32 %v461, %v331
        %v463 = vadd.f32 %v462, %v332
        %464 = vadd.xlane.f32.xlu0 %v463
        %v465 = vpop.xlane.xlu0 %464
        %v466 = vadd.f32 %v333, %v334
        %v467 = vadd.f32 %v466, %v335
        %v468 = vadd.f32 %v467, %v336
        %v469 = vadd.f32 %v468, %v337
        %v470 = vadd.f32 %v469, %v338
        %v471 = vadd.f32 %v470, %v339
        %v472 = vadd.f32 %v471, %v340
        %473 = vadd.xlane.f32.xlu0 %v472
        %v474 = vpop.xlane.xlu0 %473
        %v475 = vadd.f32 %v341, %v342
        %v476 = vadd.f32 %v475, %v343
        %v477 = vadd.f32 %v476, %v344
        %v478 = vadd.f32 %v477, %v345
        %v479 = vadd.f32 %v478, %v346
        %v480 = vadd.f32 %v479, %v347
        %v481 = vadd.f32 %v480, %v348
        %482 = vadd.xlane.f32.xlu0 %v481
        %v483 = vpop.xlane.xlu0 %482
        %v484 = vadd.f32 %v349, %v350
        %v485 = vadd.f32 %v484, %v351
        %v486 = vadd.f32 %v485, %v352
        %v487 = vadd.f32 %v486, %v353
        %v488 = vadd.f32 %v487, %v354
        %v489 = vadd.f32 %v488, %v355
        %v490 = vadd.f32 %v489, %v356
        %491 = vadd.xlane.f32.xlu0 %v490
        %v492 = vpop.xlane.xlu0 %491
        %v493 = vadd.f32 %v357, %v358
        %v494 = vadd.f32 %v493, %v359
        %v495 = vadd.f32 %v494, %v360
        %v496 = vadd.f32 %v495, %v361
        %v497 = vadd.f32 %v496, %v362
        %v498 = vadd.f32 %v497, %v363
        %v499 = vadd.f32 %v498, %v364
        %500 = vadd.xlane.f32.xlu0 %v499
        %v501 = vpop.xlane.xlu0 %500
        %v502 = vadd.f32 %v365, %v366
        %v503 = vadd.f32 %v502, %v367
        %v504 = vadd.f32 %v503, %v368
        %v505 = vadd.f32 %v504, %v369
        %v506 = vadd.f32 %v505, %v370
        %v507 = vadd.f32 %v506, %v371
        %v508 = vadd.f32 %v507, %v372
        %509 = vadd.xlane.f32.xlu0 %v508
        %v510 = vpop.xlane.xlu0 %509
        %v511 = vadd.f32 %v373, %v374
        %v512 = vadd.f32 %v511, %v375
        %v513 = vadd.f32 %v512, %v376
        %v514 = vadd.f32 %v513, %v377
        %v515 = vadd.f32 %v514, %v378
        %v516 = vadd.f32 %v515, %v379
        %v517 = vadd.f32 %v516, %v380
        %518 = vadd.xlane.f32.xlu0 %v517
        %v519 = vpop.xlane.xlu0 %518
        %v520 = vadd.f32 %v381, %v382
        %v521 = vadd.f32 %v520, %v383
        %v522 = vadd.f32 %v521, %v384
        %v523 = vadd.f32 %v522, %v385
        %v524 = vadd.f32 %v523, %v386
        %v525 = vadd.f32 %v524, %v387
        %v526 = vadd.f32 %v525, %v388
        %527 = vadd.xlane.f32.xlu0 %v526
        %v528 = vpop.xlane.xlu0 %527
        %v529 = vadd.f32 %v389, %v390
        %v530 = vadd.f32 %v529, %v391
        %v531 = vadd.f32 %v530, %v392
        %v532 = vadd.f32 %v531, %v393
        %v533 = vadd.f32 %v532, %v394
        %v534 = vadd.f32 %v533, %v395
        %v535 = vadd.f32 %v534, %v396
        %536 = vadd.xlane.f32.xlu0 %v535
        %v537 = vpop.xlane.xlu0 %536
        %v538 = vadd.f32 %v397, %v398
        %v539 = vadd.f32 %v538, %v399
        %v540 = vadd.f32 %v539, %v400
        %v541 = vadd.f32 %v540, %v401
        %v542 = vadd.f32 %v541, %v402
        %v543 = vadd.f32 %v542, %v403
        %v544 = vadd.f32 %v543, %v404
        %545 = vadd.xlane.f32.xlu0 %v544
        %v546 = vpop.xlane.xlu0 %545
        %v547 = vadd.f32 %v405, %v406
        %v548 = vadd.f32 %v547, %v407
        %v549 = vadd.f32 %v548, %v408
        %v550 = vadd.f32 %v549, %v409
        %v551 = vadd.f32 %v550, %v410
        %v552 = vadd.f32 %v551, %v411
        %v553 = vadd.f32 %v552, %v412
        %554 = vadd.xlane.f32.xlu0 %v553
        %v555 = vpop.xlane.xlu0 %554
        %v556 = vadd.f32 %v413, %v414
        %v557 = vadd.f32 %v556, %v415
        %v558 = vadd.f32 %v557, %v416
        %v559 = vadd.f32 %v558, %v417
        %v560 = vadd.f32 %v559, %v418
        %v561 = vadd.f32 %v560, %v419
        %v562 = vadd.f32 %v561, %v420
        %563 = vadd.xlane.f32.xlu0 %v562
        %v564 = vpop.xlane.xlu0 %563
        %v565 = vadd.f32 %v277, %v429
        %v566 = vadd.f32 %v278, %v438
        %v567 = vadd.f32 %v279, %v447
        %v568 = vadd.f32 %v280, %v456
        %v569 = vadd.f32 %v281, %v465
        %v570 = vadd.f32 %v282, %v474
        %v571 = vadd.f32 %v283, %v483
        %v572 = vadd.f32 %v284, %v492
        %v573 = vadd.f32 %v285, %v501
        %v574 = vadd.f32 %v286, %v510
        %v575 = vadd.f32 %v287, %v519
        %v576 = vadd.f32 %v288, %v528
        %v577 = vadd.f32 %v289, %v537
        %v578 = vadd.f32 %v290, %v546
        %v579 = vadd.f32 %v291, %v555
        %v580 = vadd.f32 %v292, %v564
        %vm581 = vcmask 7168
        %582 = vst.msk [vmem:[#allocation2] sm:$0xff] %vm581, %v565
        %583 = vst.msk [vmem:[#allocation2 + $0x8] sm:$0xff] %vm581, %v566
        %584 = vst.msk [vmem:[#allocation2 + $0x10] sm:$0xff] %vm581, %v567
        %585 = vst.msk [vmem:[#allocation2 + $0x18] sm:$0xff] %vm581, %v568
        %586 = vst.msk [vmem:[#allocation2 + $0x20] sm:$0xff] %vm581, %v569
        %587 = vst.msk [vmem:[#allocation2 + $0x28] sm:$0xff] %vm581, %v570
        %588 = vst.msk [vmem:[#allocation2 + $0x30] sm:$0xff] %vm581, %v571
        %589 = vst.msk [vmem:[#allocation2 + $0x38] sm:$0xff] %vm581, %v572
        %590 = vst.msk [vmem:[#allocation2 + $0x40] sm:$0xff] %vm581, %v573
        %591 = vst.msk [vmem:[#allocation2 + $0x48] sm:$0xff] %vm581, %v574
        %592 = vst.msk [vmem:[#allocation2 + $0x50] sm:$0xff] %vm581, %v575
        %593 = vst.msk [vmem:[#allocation2 + $0x58] sm:$0xff] %vm581, %v576
        %594 = vst.msk [vmem:[#allocation2 + $0x60] sm:$0xff] %vm581, %v577
        %595 = vst.msk [vmem:[#allocation2 + $0x68] sm:$0xff] %vm581, %v578
        %596 = vst.msk [vmem:[#allocation2 + $0x70] sm:$0xff] %vm581, %v579
        %597 = vst.msk [vmem:[#allocation2 + $0x78] sm:$0xff] %vm581, %v580
        // Predicated region
        $region41: #{tpu_custom_call.1} parent=27 // pred_check
          %p598 = pneg %p256
        $region42: #{tpu_custom_call.1} parent=27 // pred_check_branch
          %600 = sbr.rel (%p598) target = $region44
        $region43: #{tpu_custom_call.1} parent=27 // pred_region
          %v601 = vld [vmem:[%s212] sm:$0x3]
          %v602 = vld [vmem:[#allocation2] sm:$0xff]
          %v603 = vld [vmem:[#allocation2 + $0x8] sm:$0xff]
          %v604 = vld [vmem:[#allocation2 + $0x10] sm:$0xff]
          %v605 = vld [vmem:[#allocation2 + $0x18] sm:$0xff]
          %v606 = vld [vmem:[#allocation2 + $0x20] sm:$0xff]
          %v607 = vld [vmem:[#allocation2 + $0x28] sm:$0xff]
          %v608 = vld [vmem:[#allocation2 + $0x30] sm:$0xff]
          %v609 = vld [vmem:[#allocation2 + $0x38] sm:$0xff]
          %v610 = vld [vmem:[#allocation2 + $0x40] sm:$0xff]
          %v611 = vld [vmem:[#allocation2 + $0x48] sm:$0xff]
          %v612 = vld [vmem:[#allocation2 + $0x50] sm:$0xff]
          %v613 = vld [vmem:[#allocation2 + $0x58] sm:$0xff]
          %v614 = vld [vmem:[#allocation2 + $0x60] sm:$0xff]
          %v615 = vld [vmem:[#allocation2 + $0x68] sm:$0xff]
          %v616 = vld [vmem:[#allocation2 + $0x70] sm:$0xff]
          %v617 = vld [vmem:[#allocation2 + $0x78] sm:$0xff]
          %v619 = vsel %vm581, 1.0, 0
          %v622 = vsel %vm581, %v602, 0
          %v625 = vsel %vm581, %v603, 0
          %v628 = vsel %vm581, %v604, 0
          %v631 = vsel %vm581, %v605, 0
          %v634 = vsel %vm581, %v606, 0
          %v637 = vsel %vm581, %v607, 0
          %v640 = vsel %vm581, %v608, 0
          %v643 = vsel %vm581, %v609, 0
          %v646 = vsel %vm581, %v610, 0
          %v649 = vsel %vm581, %v611, 0
          %v652 = vsel %vm581, %v612, 0
          %v655 = vsel %vm581, %v613, 0
          %v658 = vsel %vm581, %v614, 0
          %v661 = vsel %vm581, %v615, 0
          %v664 = vsel %vm581, %v616, 0
          %v667 = vsel %vm581, %v617, 0
          %669 = vmatprep.subr.mxu0 0.0
          %670 = vmatpush1.xpose.msra.mxu0 %v622
          %671 = vmatprep.subr.mxu0 0.0
          %672 = vmatpush1.xpose.msra.mxu0 %v625
          %673 = vmatprep.subr.mxu0 0.0
          %674 = vmatpush1.xpose.msra.mxu0 %v628
          %675 = vmatprep.subr.mxu0 0.0
          %676 = vmatpush1.xpose.msra.mxu0 %v631
          %677 = vmatprep.subr.mxu0 0.0
          %678 = vmatpush1.xpose.msra.mxu0 %v634
          %679 = vmatprep.subr.mxu0 0.0
          %680 = vmatpush1.xpose.msra.mxu0 %v637
          %681 = vmatprep.subr.mxu0 0.0
          %682 = vmatpush1.xpose.msra.mxu0 %v640
          %683 = vmatprep.subr.mxu0 0.0
          %684 = vmatpush1.xpose.msra.mxu0 %v643
          %685 = vmatprep.subr.mxu0 0.0
          %686 = vmatpush1.xpose.msra.mxu0 %v646
          %687 = vmatprep.subr.mxu0 0.0
          %688 = vmatpush1.xpose.msra.mxu0 %v649
          %689 = vmatprep.subr.mxu0 0.0
          %690 = vmatpush1.xpose.msra.mxu0 %v652
          %691 = vmatprep.subr.mxu0 0.0
          %692 = vmatpush1.xpose.msra.mxu0 %v655
          %693 = vmatprep.subr.mxu0 0.0
          %694 = vmatpush1.xpose.msra.mxu0 %v658
          %695 = vmatprep.subr.mxu0 0.0
          %696 = vmatpush1.xpose.msra.mxu0 %v661
          %697 = vmatprep.subr.mxu0 0.0
          %698 = vmatpush1.xpose.msra.mxu0 %v664
          %699 = vmatprep.subr.mxu0 0.0
          %700 = vmatpush1.xpose.msra.mxu0 %v667
          %701 = vmatprep.subr.mxu0 0.0
          %702 = vmatpush1.xpose.msra.mxu0 0.0
          %703 = vmatprep.subr.mxu0 0.0
          %704 = vmatpush1.xpose.msra.mxu0 0.0
          %705 = vmatprep.subr.mxu0 0.0
          %706 = vmatpush1.xpose.msra.mxu0 0.0
          %707 = vmatprep.subr.mxu0 0.0
          %708 = vmatpush1.xpose.msra.mxu0 0.0
          %709 = vmatprep.subr.mxu0 0.0
          %710 = vmatpush1.xpose.msra.mxu0 0.0
          %711 = vmatprep.subr.mxu0 0.0
          %712 = vmatpush1.xpose.msra.mxu0 0.0
          %713 = vmatprep.subr.mxu0 0.0
          %714 = vmatpush1.xpose.msra.mxu0 0.0
          %715 = vmatprep.subr.mxu0 0.0
          %716 = vmatpush1.xpose.msra.mxu0 0.0
          %717 = vmatprep.subr.mxu0 0.0
          %718 = vmatpush1.xpose.msra.mxu0 0.0
          %719 = vmatprep.subr.mxu0 0.0
          %720 = vmatpush1.xpose.msra.mxu0 0.0
          %721 = vmatprep.subr.mxu0 0.0
          %722 = vmatpush1.xpose.msra.mxu0 0.0
          %723 = vmatprep.subr.mxu0 0.0
          %724 = vmatpush1.xpose.msra.mxu0 0.0
          %725 = vmatprep.subr.mxu0 0.0
          %726 = vmatpush1.xpose.msra.mxu0 0.0
          %727 = vmatprep.subr.mxu0 0.0
          %728 = vmatpush1.xpose.msra.mxu0 0.0
          %729 = vmatprep.subr.mxu0 0.0
          %730 = vmatpush1.xpose.msra.mxu0 0.0
          %731 = vmatprep.subr.mxu0 0.0
          %732 = vmatpush1.xpose.msra.mxu0 0.0
          %733 = vmatprep.mubr.f32.mxu0 0.0
          %734 = vmatmul.mubr.f32.gmra.mrb[0].mxu0 %v619
          %v735 = vpop.f32.mrb[0].mxu0
          %v736 = vadd.f32 0.0, %v735
          %v737 = vpop.f32.mrb[0].mxu0
          %738 = vdwg.mxu0
          %v739 = vmul.f32 %v601, 0.2
          %v740 = vsub.f32 %v739, %v736
          %741 = vst [vmem:[%s246] sm:$0x3] %v740
          %v742 = vmul.f32 %v601, 0.04
          %743 = vst [vmem:[%s253] sm:$0x3] %v742
        $region44: #{tpu_custom_call.1} parent=27 // pred_fallthru
          _
        %s744 = sand.u32 %s101, 1
        %s745 = scalar_lea.sflag [#allocation5], %s744
        %s746 = sand.u32 %s101, 1
        %s747 = smul.addr %s746, 2
        %s748 = scalar_lea.vmem [#allocation8], %s747
        %s749 = sand.u32 %s127, 1
        %s750 = scalar_lea.sflag [#allocation10], %s749
        %s751 = sand.u32 %s127, 1
        %s752 = smul.addr %s751, 2
        %s753 = scalar_lea.vmem [#allocation9], %s752
        // Predicated region
        $region45: #{tpu_custom_call.1} parent=27 // pred_check
          %p754 = pneg %p111
        $region46: #{tpu_custom_call.1} parent=27 // pred_check_branch
          %756 = sbr.rel (%p754) target = $region48
        $region47: #{tpu_custom_call.1} parent=27 // pred_region
          %s758 = ssub.s32 32, 32
          %759 = vsyncadd %s745, %s758
          %s760 = smul.addr %s31, 32
          %s761 = scalar_lea.hbm %s2, %s760
          %s763 = sshll.u32 %s748, 4
          %s764 = int_to_ptr.vmem [resolvable:$true] %s763
          %766 = dma.vmem_to_hbm [thread:$0]  %s764, 32, %s761, %s745
        $region48: #{tpu_custom_call.1} parent=27 // pred_fallthru
          _
        // Predicated region
        $region49: #{tpu_custom_call.1} parent=27 // pred_check
          %p767 = pneg %p137
        $region50: #{tpu_custom_call.1} parent=27 // pred_check_branch
          %769 = sbr.rel (%p767) target = $region52
        $region51: #{tpu_custom_call.1} parent=27 // pred_region
          %s771 = ssub.s32 32, 32
          %772 = vsyncadd %s750, %s771
          %s773 = smul.addr %s31, 32
          %s774 = scalar_lea.hbm %s3, %s773
          %s776 = sshll.u32 %s753, 4
          %s777 = int_to_ptr.vmem [resolvable:$true] %s776
          %779 = dma.vmem_to_hbm [thread:$0]  %s777, 32, %s774, %s750
        $region52: #{tpu_custom_call.1} parent=27 // pred_fallthru
          _
      $region28: #{tpu_custom_call.1} parent=5 // pred_fallthru
        _
      %p780 = scmp.le.s32.totalorder 2, %s22
      // Predicated region
      $region53: #{tpu_custom_call.1} parent=5 // pred_check
        %p781 = pneg %p780
      $region54: #{tpu_custom_call.1} parent=5 // pred_check_branch
        %783 = sbr.rel (%p781) target = $region56
      $region55: #{tpu_custom_call.1} parent=5 // pred_region
        %s784 = ssub.s32 %s22, 2
        // Predicated region
        $region57: #{tpu_custom_call.1} parent=55 // pred_check
          %p785 = pneg %p117
        $region58: #{tpu_custom_call.1} parent=55 // pred_check_branch
          %787 = sbr.rel (%p785) target = $region60
        $region59: #{tpu_custom_call.1} parent=55 // pred_region
          %s788 = sand.u32 %s102, 1
          %s789 = scalar_lea.sflag [#allocation5], %s788
          %s790 = sand.u32 %s102, 1
          %s791 = smul.addr %s790, 2
          %s792 = scalar_lea.vmem [#allocation8], %s791
          %793 = dma.done %s789, 32
        $region60: #{tpu_custom_call.1} parent=55 // pred_fallthru
          _
        // Predicated region
        $region61: #{tpu_custom_call.1} parent=55 // pred_check
          %p794 = pneg %p143
        $region62: #{tpu_custom_call.1} parent=55 // pred_check_branch
          %796 = sbr.rel (%p794) target = $region64
        $region63: #{tpu_custom_call.1} parent=55 // pred_region
          %s797 = sand.u32 %s128, 1
          %s798 = scalar_lea.sflag [#allocation10], %s797
          %s799 = sand.u32 %s128, 1
          %s800 = smul.addr %s799, 2
          %s801 = scalar_lea.vmem [#allocation9], %s800
          %802 = dma.done %s798, 32
        $region64: #{tpu_custom_call.1} parent=55 // pred_fallthru
          _
      $region56: #{tpu_custom_call.1} parent=5 // pred_fallthru
        _
    $region6: #{tpu_custom_call.1} parent=1 // loop_footer
      %s26 = sadd.s32 1, %s22
    $region7: #{tpu_custom_call.1} parent=1 // loop_footer_branch
      %21 = sbr.rel target = $region3
    $region8: #{tpu_custom_call.1} parent=1 // loop_exit
      _
    %803 = vsyncpa [#allocation4], 1
    %s804 = scalar_lea.sflag [#allocation4], 1
    %805 = vsyncpa %s804, 1
    %806 = vsyncpa [#allocation7], 1
    %s807 = scalar_lea.sflag [#allocation7], 1
    %808 = vsyncpa %s807, 1
    %809 = vsyncpa [#allocation5], 1
    %s810 = scalar_lea.sflag [#allocation5], 1
    %811 = vsyncpa %s810, 1
    %812 = vsyncpa [#allocation10], 1
    %s813 = scalar_lea.sflag [#allocation10], 1
    %814 = vsyncpa %s813, 1

</llo_original>
